<compile_context>
chip_gen: v6e
topology: v6e:2x2x1
jax: 0.10.0
libtpu: 0.0.40
codegen_flags: <defaults>
</compile_context>

<pallas_src>
import jax
import jax.numpy as jnp
from jax.experimental import pallas as pl
from jax.experimental.pallas import tpu as pltpu


def _agru_kernel(facts_ref, g_ref, wcat_ref, ucat_ref, bfw_ref, bu_ref, out_ref):
    # facts_ref: (S*TB, H) bf16   rows ordered [sid major, batch-in-tile minor]
    # g_ref:     (S, TB, 1) f32
    # wcat_ref:  (H, 2H)   bf16   [Wr^T | W^T]
    # ucat_ref:  (H, 2H)   f32    [Ur^T | U^T]
    # bfw_ref:   (1, 2H)   f32    [Wr_b + Ur_b | W_b]
    # bu_ref:    (1, H)    f32    U_b
    S, TB, _ = g_ref.shape
    H = facts_ref.shape[-1]

    # ---- Hoisted fact-side matmul: single big MXU push, off the serial chain.
    a_all = jnp.dot(facts_ref[...], wcat_ref[...],
                    preferred_element_type=jnp.float32) + bfw_ref[...]   # (S*TB, 2H) f32

    ucat = ucat_ref[...]          # (H, 2H) f32, reused every step
    bias_u = bu_ref[...]          # (1, H)  f32

    C = jnp.zeros((TB, H), jnp.float32)
    # Fully unrolled recurrence (S is a trace-time constant); only the small
    # C-dependent matmul + sigmoid/tanh + blend live on the serial chain.
    for sid in range(S):
        a = a_all[sid * TB:(sid + 1) * TB, :]        # (TB, 2H) static sublane slice
        g = g_ref[sid]                               # (TB, 1)  static leading index

        b = jnp.dot(C, ucat, preferred_element_type=jnp.float32)   # (TB, 2H) f32 MXU
        r = jax.nn.sigmoid(a[:, :H] + b[:, :H])                    # (TB, H)
        h_tilda = jnp.tanh(a[:, H:] + r * (b[:, H:] + bias_u))     # (TB, H)
        C = C + g * (h_tilda - C)                                   # g*h + (1-g)*C

    out_ref[...] = C.astype(out_ref.dtype)


def attention_gru_pallas(facts, G, params, *, batch_tile=None):
    """facts: (B, S, H) f32, G: (B, S) f32 -> (B, H) f32."""
    B, S, H = facts.shape

    # The module uses facts' last dim both as the contraction dim and as the
    # hidden dim of the r/h split: require input_size == hidden_size loudly.
    for name in ("Wr_w", "Ur_w", "W_w", "U_w"):
        assert params[name].shape == (H, H), (
            f"{name} must be ({H},{H}); input_size must equal hidden_size")

    # Batch tile: whole batch for small B, else a multiple of 8 that divides B.
    if batch_tile is None:
        batch_tile = B if B <= 256 else 256
    TB = batch_tile
    if B % TB != 0:
        TB = B
    assert B % TB == 0
    assert TB == B or TB % 8 == 0, "batch tile must be a multiple of 8"
    nb = B // TB

    # ---- Weight / bias fusion (PyTorch (out,in) convention -> (in, 2H)). ----
    wcat = jnp.concatenate([params["Wr_w"].T, params["W_w"].T], axis=1)      # (H, 2H)
    wcat = wcat.astype(jnp.bfloat16)
    ucat = jnp.concatenate([params["Ur_w"].T, params["U_w"].T], axis=1)      # (H, 2H)
    ucat = ucat.astype(jnp.float32)           # recurrent matmul stays in f32
    bias_fw = jnp.concatenate([params["Wr_b"] + params["Ur_b"],
                               params["W_b"]]).reshape(1, 2 * H).astype(jnp.float32)
    bias_u = params["U_b"].reshape(1, H).astype(jnp.float32)

    # ---- Layout plumbing in the wrapper (cheap XLA ops, keeps kernel free of
    #      gathers/reshapes): facts -> (nb, S*TB, H) bf16, G -> (S, B, 1) f32.
    facts_p = (facts.astype(jnp.bfloat16)
               .reshape(nb, TB, S, H)
               .transpose(0, 2, 1, 3)          # (nb, S, TB, H)
               .reshape(nb, S * TB, H))
    g_p = jnp.transpose(G, (1, 0)).astype(jnp.float32)[..., None]            # (S, B, 1)

    full = lambda shape: pl.BlockSpec(shape, lambda b: tuple(0 for _ in shape))

    return pl.pallas_call(
        _agru_kernel,
        out_shape=jax.ShapeDtypeStruct((B, H), facts.dtype),
        grid=(nb,),
        in_specs=[
            pl.BlockSpec((None, S * TB, H), lambda b: (b, 0, 0)),   # facts tile
            pl.BlockSpec((S, TB, 1), lambda b: (0, b, 0)),          # gates tile
            full((H, 2 * H)),                                       # wcat
            full((H, 2 * H)),                                       # ucat
            full((1, 2 * H)),                                       # fused fact bias
            full((1, H)),                                           # U bias
        ],
        out_specs=pl.BlockSpec((TB, H), lambda b: (b, 0)),
        compiler_params=pltpu.CompilerParams(
            dimension_semantics=("parallel",)),                     # 2 TCs on v7x
    )(facts_p, g_p, wcat, ucat, bias_fw, bias_u)


def attention_gru_ref(facts, G, params):
    """Pure-JAX f32 reference mirroring the PyTorch loop."""
    B, S, H = facts.shape
    C = jnp.zeros((B, H), jnp.float32)
    for sid in range(S):
        fact = facts[:, sid, :]
        g = G[:, sid][:, None]
        r = jax.nn.sigmoid(fact @ params["Wr_w"].T + params["Wr_b"]
                           + C @ params["Ur_w"].T + params["Ur_b"])
        h_tilda = jnp.tanh(fact @ params["W_w"].T + params["W_b"]
                           + r * (C @ params["U_w"].T + params["U_b"]))
        C = g * h_tilda + (1.0 - g) * C
    return C


def init_params(key, input_size, hidden_size):
    """Deterministic synthetic params matching AttentionGRUCell.init_weights()."""
    ks = jax.random.split(key, 4)
    std = 0.02
    return {
        "Wr_w": std * jax.random.normal(ks[0], (hidden_size, input_size), jnp.float32),
        "Wr_b": jnp.zeros((hidden_size,), jnp.float32),
        "Ur_w": std * jax.random.normal(ks[1], (hidden_size, hidden_size), jnp.float32),
        "Ur_b": jnp.zeros((hidden_size,), jnp.float32),
        "W_w": std * jax.random.normal(ks[2], (hidden_size, input_size), jnp.float32),
        "W_b": jnp.zeros((hidden_size,), jnp.float32),
        "U_w": std * jax.random.normal(ks[3], (hidden_size, hidden_size), jnp.float32),
        "U_b": jnp.zeros((hidden_size,), jnp.float32),
    }


if __name__ == "__main__":
    B, S, H = 8, 8, 32   # batch, #sentences, hidden (= embedding = input_size)
    key = jax.random.PRNGKey(0)
    k_f, k_g, k_p = jax.random.split(key, 3)

    facts = jax.random.normal(k_f, (B, S, H), jnp.float32)
    G = jax.nn.softmax(jax.random.normal(k_g, (B, S), jnp.float32), axis=-1)
    params = init_params(k_p, H, H)

    out = attention_gru_pallas(facts, G, params)
    out = jax.block_until_ready(out)

    ref = attention_gru_ref(facts, G, params)
    assert out.shape == (B, H)
    # Only the hoisted fact-side matmul runs in bf16 (f32 accumulation); the
    # recurrent C-side matmul and all elementwise math stay in f32, so the
    # observed error is well below this tolerance.
    assert jnp.allclose(out, ref, atol=1e-2, rtol=1e-2), "mismatch vs reference"

    print("KERNEL_OK")
</pallas_src>

<mosaic_0001>
module attributes {stable_mosaic.version = 11 : i64} {
  func.func @_agru_kernel(%arg0: i32, %arg1: memref<1x64x32xbf16, #tpu.memory_space<vmem>>, %arg2: memref<8x8x1xf32, #tpu.memory_space<vmem>>, %arg3: memref<32x64xbf16, #tpu.memory_space<vmem>>, %arg4: memref<32x64xf32, #tpu.memory_space<vmem>>, %arg5: memref<1x64xf32, #tpu.memory_space<vmem>>, %arg6: memref<1x32xf32, #tpu.memory_space<vmem>>, %arg7: memref<8x32xf32, #tpu.memory_space<vmem>>) attributes {dimension_semantics = [#tpu.dimension_semantics<parallel>], iteration_bounds = array<i64: 1>, scalar_prefetch = 0 : i64, scratch_operands = 0 : i64, tpu.core_type = #tpu.core_type<tc>, window_params = [{transform_indices = @transform_0, window_bounds = array<i64: 1, 64, 32>}, {transform_indices = @transform_1, window_bounds = array<i64: 8, 8, 1>}, {pipeline_mode = #tpu.pipeline_mode<synchronous>, transform_indices = @transform_2, window_bounds = array<i64: 32, 64>}, {pipeline_mode = #tpu.pipeline_mode<synchronous>, transform_indices = @transform_3, window_bounds = array<i64: 32, 64>}, {pipeline_mode = #tpu.pipeline_mode<synchronous>, transform_indices = @transform_4, window_bounds = array<i64: 1, 64>}, {pipeline_mode = #tpu.pipeline_mode<synchronous>, transform_indices = @transform_5, window_bounds = array<i64: 1, 32>}, {transform_indices = @transform_6, window_bounds = array<i64: 8, 32>}]} {
    %c0 = arith.constant 0 : index
    %c0_0 = arith.constant 0 : index
    %c0_1 = arith.constant 0 : index
    %0 = vector.load %arg1[%c0, %c0_0, %c0_1] : memref<1x64x32xbf16, #tpu.memory_space<vmem>>, vector<1x64x32xbf16>
    %1 = vector.shape_cast %0 : vector<1x64x32xbf16> to vector<64x32xbf16>
    %c0_2 = arith.constant 0 : index
    %c0_3 = arith.constant 0 : index
    %2 = vector.load %arg3[%c0_2, %c0_3] : memref<32x64xbf16, #tpu.memory_space<vmem>>, vector<32x64xbf16>
    %cst = arith.constant dense<0.000000e+00> : vector<64x64xf32>
    %3 = tpu.matmul %1, %2, %cst {dimension_numbers = #tpu.dot_dimension_numbers<[1], [0], [0], [1], [0, 0, 1, 1], [], []>} : vector<64x32xbf16>, vector<32x64xbf16>, vector<64x64xf32> -> vector<64x64xf32>
    %c0_4 = arith.constant 0 : index
    %c0_5 = arith.constant 0 : index
    %4 = vector.load %arg5[%c0_4, %c0_5] : memref<1x64xf32, #tpu.memory_space<vmem>>, vector<1x64xf32>
    %5 = vector.broadcast %4 : vector<1x64xf32> to vector<64x64xf32>
    %6 = arith.addf %3, %5 : vector<64x64xf32>
    %c0_6 = arith.constant 0 : index
    %c0_7 = arith.constant 0 : index
    %7 = vector.load %arg4[%c0_6, %c0_7] : memref<32x64xf32, #tpu.memory_space<vmem>>, vector<32x64xf32>
    %c0_8 = arith.constant 0 : index
    %c0_9 = arith.constant 0 : index
    %8 = vector.load %arg6[%c0_8, %c0_9] : memref<1x32xf32, #tpu.memory_space<vmem>>, vector<1x32xf32>
    %cst_10 = arith.constant 0.000000e+00 : f32
    %9 = vector.broadcast %cst_10 : f32 to vector<8x32xf32>
    %10 = vector.extract_strided_slice %6 {offsets = [0, 0], sizes = [8, 64], strides = [1, 1]} : vector<64x64xf32> to vector<8x64xf32>
    %c0_11 = arith.constant 0 : index
    %c0_12 = arith.constant 0 : index
    %c0_13 = arith.constant 0 : index
    %11 = vector.load %arg2[%c0_11, %c0_12, %c0_13] : memref<8x8x1xf32, #tpu.memory_space<vmem>>, vector<1x8x1xf32>
    %12 = vector.shape_cast %11 : vector<1x8x1xf32> to vector<8x1xf32>
    %cst_14 = arith.constant dense<0.000000e+00> : vector<8x64xf32>
    %13 = tpu.matmul %9, %7, %cst_14 {dimension_numbers = #tpu.dot_dimension_numbers<[1], [0], [0], [1], [0, 0, 1, 1], [], []>} : vector<8x32xf32>, vector<32x64xf32>, vector<8x64xf32> -> vector<8x64xf32>
    %14 = vector.extract_strided_slice %10 {offsets = [0, 0], sizes = [8, 32], strides = [1, 1]} : vector<8x64xf32> to vector<8x32xf32>
    %15 = vector.extract_strided_slice %13 {offsets = [0, 0], sizes = [8, 32], strides = [1, 1]} : vector<8x64xf32> to vector<8x32xf32>
    %16 = arith.addf %14, %15 : vector<8x32xf32>
    %17 = arith.negf %16 : vector<8x32xf32>
    %18 = math.exp %17 : vector<8x32xf32>
    %cst_15 = arith.constant 1.000000e+00 : f32
    %19 = vector.broadcast %cst_15 : f32 to vector<8x32xf32>
    %20 = arith.addf %19, %18 : vector<8x32xf32>
    %21 = arith.divf %19, %20 : vector<8x32xf32>
    %22 = vector.extract_strided_slice %10 {offsets = [0, 32], sizes = [8, 32], strides = [1, 1]} : vector<8x64xf32> to vector<8x32xf32>
    %23 = vector.extract_strided_slice %13 {offsets = [0, 32], sizes = [8, 32], strides = [1, 1]} : vector<8x64xf32> to vector<8x32xf32>
    %24 = vector.broadcast %8 : vector<1x32xf32> to vector<8x32xf32>
    %25 = arith.addf %23, %24 : vector<8x32xf32>
    %26 = arith.mulf %21, %25 : vector<8x32xf32>
    %27 = arith.addf %22, %26 : vector<8x32xf32>
    %28 = math.tanh %27 : vector<8x32xf32>
    %29 = arith.subf %28, %9 : vector<8x32xf32>
    %30 = vector.broadcast %12 : vector<8x1xf32> to vector<8x32xf32>
    %31 = arith.mulf %30, %29 : vector<8x32xf32>
    %32 = arith.addf %9, %31 : vector<8x32xf32>
    %33 = vector.extract_strided_slice %6 {offsets = [8, 0], sizes = [8, 64], strides = [1, 1]} : vector<64x64xf32> to vector<8x64xf32>
    %c1 = arith.constant 1 : index
    %c0_16 = arith.constant 0 : index
    %c0_17 = arith.constant 0 : index
    %34 = vector.load %arg2[%c1, %c0_16, %c0_17] : memref<8x8x1xf32, #tpu.memory_space<vmem>>, vector<1x8x1xf32>
    %35 = vector.shape_cast %34 : vector<1x8x1xf32> to vector<8x1xf32>
    %cst_18 = arith.constant dense<0.000000e+00> : vector<8x64xf32>
    %36 = tpu.matmul %32, %7, %cst_18 {dimension_numbers = #tpu.dot_dimension_numbers<[1], [0], [0], [1], [0, 0, 1, 1], [], []>} : vector<8x32xf32>, vector<32x64xf32>, vector<8x64xf32> -> vector<8x64xf32>
    %37 = vector.extract_strided_slice %33 {offsets = [0, 0], sizes = [8, 32], strides = [1, 1]} : vector<8x64xf32> to vector<8x32xf32>
    %38 = vector.extract_strided_slice %36 {offsets = [0, 0], sizes = [8, 32], strides = [1, 1]} : vector<8x64xf32> to vector<8x32xf32>
    %39 = arith.addf %37, %38 : vector<8x32xf32>
    %40 = arith.negf %39 : vector<8x32xf32>
    %41 = math.exp %40 : vector<8x32xf32>
    %cst_19 = arith.constant 1.000000e+00 : f32
    %42 = vector.broadcast %cst_19 : f32 to vector<8x32xf32>
    %43 = arith.addf %42, %41 : vector<8x32xf32>
    %44 = arith.divf %42, %43 : vector<8x32xf32>
    %45 = vector.extract_strided_slice %33 {offsets = [0, 32], sizes = [8, 32], strides = [1, 1]} : vector<8x64xf32> to vector<8x32xf32>
    %46 = vector.extract_strided_slice %36 {offsets = [0, 32], sizes = [8, 32], strides = [1, 1]} : vector<8x64xf32> to vector<8x32xf32>
    %47 = vector.broadcast %8 : vector<1x32xf32> to vector<8x32xf32>
    %48 = arith.addf %46, %47 : vector<8x32xf32>
    %49 = arith.mulf %44, %48 : vector<8x32xf32>
    %50 = arith.addf %45, %49 : vector<8x32xf32>
    %51 = math.tanh %50 : vector<8x32xf32>
    %52 = arith.subf %51, %32 : vector<8x32xf32>
    %53 = vector.broadcast %35 : vector<8x1xf32> to vector<8x32xf32>
    %54 = arith.mulf %53, %52 : vector<8x32xf32>
    %55 = arith.addf %32, %54 : vector<8x32xf32>
    %56 = vector.extract_strided_slice %6 {offsets = [16, 0], sizes = [8, 64], strides = [1, 1]} : vector<64x64xf32> to vector<8x64xf32>
    %c2 = arith.constant 2 : index
    %c0_20 = arith.constant 0 : index
    %c0_21 = arith.constant 0 : index
    %57 = vector.load %arg2[%c2, %c0_20, %c0_21] : memref<8x8x1xf32, #tpu.memory_space<vmem>>, vector<1x8x1xf32>
    %58 = vector.shape_cast %57 : vector<1x8x1xf32> to vector<8x1xf32>
    %cst_22 = arith.constant dense<0.000000e+00> : vector<8x64xf32>
    %59 = tpu.matmul %55, %7, %cst_22 {dimension_numbers = #tpu.dot_dimension_numbers<[1], [0], [0], [1], [0, 0, 1, 1], [], []>} : vector<8x32xf32>, vector<32x64xf32>, vector<8x64xf32> -> vector<8x64xf32>
    %60 = vector.extract_strided_slice %56 {offsets = [0, 0], sizes = [8, 32], strides = [1, 1]} : vector<8x64xf32> to vector<8x32xf32>
    %61 = vector.extract_strided_slice %59 {offsets = [0, 0], sizes = [8, 32], strides = [1, 1]} : vector<8x64xf32> to vector<8x32xf32>
    %62 = arith.addf %60, %61 : vector<8x32xf32>
    %63 = arith.negf %62 : vector<8x32xf32>
    %64 = math.exp %63 : vector<8x32xf32>
    %cst_23 = arith.constant 1.000000e+00 : f32
    %65 = vector.broadcast %cst_23 : f32 to vector<8x32xf32>
    %66 = arith.addf %65, %64 : vector<8x32xf32>
    %67 = arith.divf %65, %66 : vector<8x32xf32>
    %68 = vector.extract_strided_slice %56 {offsets = [0, 32], sizes = [8, 32], strides = [1, 1]} : vector<8x64xf32> to vector<8x32xf32>
    %69 = vector.extract_strided_slice %59 {offsets = [0, 32], sizes = [8, 32], strides = [1, 1]} : vector<8x64xf32> to vector<8x32xf32>
    %70 = vector.broadcast %8 : vector<1x32xf32> to vector<8x32xf32>
    %71 = arith.addf %69, %70 : vector<8x32xf32>
    %72 = arith.mulf %67, %71 : vector<8x32xf32>
    %73 = arith.addf %68, %72 : vector<8x32xf32>
    %74 = math.tanh %73 : vector<8x32xf32>
    %75 = arith.subf %74, %55 : vector<8x32xf32>
    %76 = vector.broadcast %58 : vector<8x1xf32> to vector<8x32xf32>
    %77 = arith.mulf %76, %75 : vector<8x32xf32>
    %78 = arith.addf %55, %77 : vector<8x32xf32>
    %79 = vector.extract_strided_slice %6 {offsets = [24, 0], sizes = [8, 64], strides = [1, 1]} : vector<64x64xf32> to vector<8x64xf32>
    %c3 = arith.constant 3 : index
    %c0_24 = arith.constant 0 : index
    %c0_25 = arith.constant 0 : index
    %80 = vector.load %arg2[%c3, %c0_24, %c0_25] : memref<8x8x1xf32, #tpu.memory_space<vmem>>, vector<1x8x1xf32>
    %81 = vector.shape_cast %80 : vector<1x8x1xf32> to vector<8x1xf32>
    %cst_26 = arith.constant dense<0.000000e+00> : vector<8x64xf32>
    %82 = tpu.matmul %78, %7, %cst_26 {dimension_numbers = #tpu.dot_dimension_numbers<[1], [0], [0], [1], [0, 0, 1, 1], [], []>} : vector<8x32xf32>, vector<32x64xf32>, vector<8x64xf32> -> vector<8x64xf32>
    %83 = vector.extract_strided_slice %79 {offsets = [0, 0], sizes = [8, 32], strides = [1, 1]} : vector<8x64xf32> to vector<8x32xf32>
    %84 = vector.extract_strided_slice %82 {offsets = [0, 0], sizes = [8, 32], strides = [1, 1]} : vector<8x64xf32> to vector<8x32xf32>
    %85 = arith.addf %83, %84 : vector<8x32xf32>
    %86 = arith.negf %85 : vector<8x32xf32>
    %87 = math.exp %86 : vector<8x32xf32>
    %cst_27 = arith.constant 1.000000e+00 : f32
    %88 = vector.broadcast %cst_27 : f32 to vector<8x32xf32>
    %89 = arith.addf %88, %87 : vector<8x32xf32>
    %90 = arith.divf %88, %89 : vector<8x32xf32>
    %91 = vector.extract_strided_slice %79 {offsets = [0, 32], sizes = [8, 32], strides = [1, 1]} : vector<8x64xf32> to vector<8x32xf32>
    %92 = vector.extract_strided_slice %82 {offsets = [0, 32], sizes = [8, 32], strides = [1, 1]} : vector<8x64xf32> to vector<8x32xf32>
    %93 = vector.broadcast %8 : vector<1x32xf32> to vector<8x32xf32>
    %94 = arith.addf %92, %93 : vector<8x32xf32>
    %95 = arith.mulf %90, %94 : vector<8x32xf32>
    %96 = arith.addf %91, %95 : vector<8x32xf32>
    %97 = math.tanh %96 : vector<8x32xf32>
    %98 = arith.subf %97, %78 : vector<8x32xf32>
    %99 = vector.broadcast %81 : vector<8x1xf32> to vector<8x32xf32>
    %100 = arith.mulf %99, %98 : vector<8x32xf32>
    %101 = arith.addf %78, %100 : vector<8x32xf32>
    %102 = vector.extract_strided_slice %6 {offsets = [32, 0], sizes = [8, 64], strides = [1, 1]} : vector<64x64xf32> to vector<8x64xf32>
    %c4 = arith.constant 4 : index
    %c0_28 = arith.constant 0 : index
    %c0_29 = arith.constant 0 : index
    %103 = vector.load %arg2[%c4, %c0_28, %c0_29] : memref<8x8x1xf32, #tpu.memory_space<vmem>>, vector<1x8x1xf32>
    %104 = vector.shape_cast %103 : vector<1x8x1xf32> to vector<8x1xf32>
    %cst_30 = arith.constant dense<0.000000e+00> : vector<8x64xf32>
    %105 = tpu.matmul %101, %7, %cst_30 {dimension_numbers = #tpu.dot_dimension_numbers<[1], [0], [0], [1], [0, 0, 1, 1], [], []>} : vector<8x32xf32>, vector<32x64xf32>, vector<8x64xf32> -> vector<8x64xf32>
    %106 = vector.extract_strided_slice %102 {offsets = [0, 0], sizes = [8, 32], strides = [1, 1]} : vector<8x64xf32> to vector<8x32xf32>
    %107 = vector.extract_strided_slice %105 {offsets = [0, 0], sizes = [8, 32], strides = [1, 1]} : vector<8x64xf32> to vector<8x32xf32>
    %108 = arith.addf %106, %107 : vector<8x32xf32>
    %109 = arith.negf %108 : vector<8x32xf32>
    %110 = math.exp %109 : vector<8x32xf32>
    %cst_31 = arith.constant 1.000000e+00 : f32
    %111 = vector.broadcast %cst_31 : f32 to vector<8x32xf32>
    %112 = arith.addf %111, %110 : vector<8x32xf32>
    %113 = arith.divf %111, %112 : vector<8x32xf32>
    %114 = vector.extract_strided_slice %102 {offsets = [0, 32], sizes = [8, 32], strides = [1, 1]} : vector<8x64xf32> to vector<8x32xf32>
    %115 = vector.extract_strided_slice %105 {offsets = [0, 32], sizes = [8, 32], strides = [1, 1]} : vector<8x64xf32> to vector<8x32xf32>
    %116 = vector.broadcast %8 : vector<1x32xf32> to vector<8x32xf32>
    %117 = arith.addf %115, %116 : vector<8x32xf32>
    %118 = arith.mulf %113, %117 : vector<8x32xf32>
    %119 = arith.addf %114, %118 : vector<8x32xf32>
    %120 = math.tanh %119 : vector<8x32xf32>
    %121 = arith.subf %120, %101 : vector<8x32xf32>
    %122 = vector.broadcast %104 : vector<8x1xf32> to vector<8x32xf32>
    %123 = arith.mulf %122, %121 : vector<8x32xf32>
    %124 = arith.addf %101, %123 : vector<8x32xf32>
    %125 = vector.extract_strided_slice %6 {offsets = [40, 0], sizes = [8, 64], strides = [1, 1]} : vector<64x64xf32> to vector<8x64xf32>
    %c5 = arith.constant 5 : index
    %c0_32 = arith.constant 0 : index
    %c0_33 = arith.constant 0 : index
    %126 = vector.load %arg2[%c5, %c0_32, %c0_33] : memref<8x8x1xf32, #tpu.memory_space<vmem>>, vector<1x8x1xf32>
    %127 = vector.shape_cast %126 : vector<1x8x1xf32> to vector<8x1xf32>
    %cst_34 = arith.constant dense<0.000000e+00> : vector<8x64xf32>
    %128 = tpu.matmul %124, %7, %cst_34 {dimension_numbers = #tpu.dot_dimension_numbers<[1], [0], [0], [1], [0, 0, 1, 1], [], []>} : vector<8x32xf32>, vector<32x64xf32>, vector<8x64xf32> -> vector<8x64xf32>
    %129 = vector.extract_strided_slice %125 {offsets = [0, 0], sizes = [8, 32], strides = [1, 1]} : vector<8x64xf32> to vector<8x32xf32>
    %130 = vector.extract_strided_slice %128 {offsets = [0, 0], sizes = [8, 32], strides = [1, 1]} : vector<8x64xf32> to vector<8x32xf32>
    %131 = arith.addf %129, %130 : vector<8x32xf32>
    %132 = arith.negf %131 : vector<8x32xf32>
    %133 = math.exp %132 : vector<8x32xf32>
    %cst_35 = arith.constant 1.000000e+00 : f32
    %134 = vector.broadcast %cst_35 : f32 to vector<8x32xf32>
    %135 = arith.addf %134, %133 : vector<8x32xf32>
    %136 = arith.divf %134, %135 : vector<8x32xf32>
    %137 = vector.extract_strided_slice %125 {offsets = [0, 32], sizes = [8, 32], strides = [1, 1]} : vector<8x64xf32> to vector<8x32xf32>
    %138 = vector.extract_strided_slice %128 {offsets = [0, 32], sizes = [8, 32], strides = [1, 1]} : vector<8x64xf32> to vector<8x32xf32>
    %139 = vector.broadcast %8 : vector<1x32xf32> to vector<8x32xf32>
    %140 = arith.addf %138, %139 : vector<8x32xf32>
    %141 = arith.mulf %136, %140 : vector<8x32xf32>
    %142 = arith.addf %137, %141 : vector<8x32xf32>
    %143 = math.tanh %142 : vector<8x32xf32>
    %144 = arith.subf %143, %124 : vector<8x32xf32>
    %145 = vector.broadcast %127 : vector<8x1xf32> to vector<8x32xf32>
    %146 = arith.mulf %145, %144 : vector<8x32xf32>
    %147 = arith.addf %124, %146 : vector<8x32xf32>
    %148 = vector.extract_strided_slice %6 {offsets = [48, 0], sizes = [8, 64], strides = [1, 1]} : vector<64x64xf32> to vector<8x64xf32>
    %c6 = arith.constant 6 : index
    %c0_36 = arith.constant 0 : index
    %c0_37 = arith.constant 0 : index
    %149 = vector.load %arg2[%c6, %c0_36, %c0_37] : memref<8x8x1xf32, #tpu.memory_space<vmem>>, vector<1x8x1xf32>
    %150 = vector.shape_cast %149 : vector<1x8x1xf32> to vector<8x1xf32>
    %cst_38 = arith.constant dense<0.000000e+00> : vector<8x64xf32>
    %151 = tpu.matmul %147, %7, %cst_38 {dimension_numbers = #tpu.dot_dimension_numbers<[1], [0], [0], [1], [0, 0, 1, 1], [], []>} : vector<8x32xf32>, vector<32x64xf32>, vector<8x64xf32> -> vector<8x64xf32>
    %152 = vector.extract_strided_slice %148 {offsets = [0, 0], sizes = [8, 32], strides = [1, 1]} : vector<8x64xf32> to vector<8x32xf32>
    %153 = vector.extract_strided_slice %151 {offsets = [0, 0], sizes = [8, 32], strides = [1, 1]} : vector<8x64xf32> to vector<8x32xf32>
    %154 = arith.addf %152, %153 : vector<8x32xf32>
    %155 = arith.negf %154 : vector<8x32xf32>
    %156 = math.exp %155 : vector<8x32xf32>
    %cst_39 = arith.constant 1.000000e+00 : f32
    %157 = vector.broadcast %cst_39 : f32 to vector<8x32xf32>
    %158 = arith.addf %157, %156 : vector<8x32xf32>
    %159 = arith.divf %157, %158 : vector<8x32xf32>
    %160 = vector.extract_strided_slice %148 {offsets = [0, 32], sizes = [8, 32], strides = [1, 1]} : vector<8x64xf32> to vector<8x32xf32>
    %161 = vector.extract_strided_slice %151 {offsets = [0, 32], sizes = [8, 32], strides = [1, 1]} : vector<8x64xf32> to vector<8x32xf32>
    %162 = vector.broadcast %8 : vector<1x32xf32> to vector<8x32xf32>
    %163 = arith.addf %161, %162 : vector<8x32xf32>
    %164 = arith.mulf %159, %163 : vector<8x32xf32>
    %165 = arith.addf %160, %164 : vector<8x32xf32>
    %166 = math.tanh %165 : vector<8x32xf32>
    %167 = arith.subf %166, %147 : vector<8x32xf32>
    %168 = vector.broadcast %150 : vector<8x1xf32> to vector<8x32xf32>
    %169 = arith.mulf %168, %167 : vector<8x32xf32>
    %170 = arith.addf %147, %169 : vector<8x32xf32>
    %171 = vector.extract_strided_slice %6 {offsets = [56, 0], sizes = [8, 64], strides = [1, 1]} : vector<64x64xf32> to vector<8x64xf32>
    %c7 = arith.constant 7 : index
    %c0_40 = arith.constant 0 : index
    %c0_41 = arith.constant 0 : index
    %172 = vector.load %arg2[%c7, %c0_40, %c0_41] : memref<8x8x1xf32, #tpu.memory_space<vmem>>, vector<1x8x1xf32>
    %173 = vector.shape_cast %172 : vector<1x8x1xf32> to vector<8x1xf32>
    %cst_42 = arith.constant dense<0.000000e+00> : vector<8x64xf32>
    %174 = tpu.matmul %170, %7, %cst_42 {dimension_numbers = #tpu.dot_dimension_numbers<[1], [0], [0], [1], [0, 0, 1, 1], [], []>} : vector<8x32xf32>, vector<32x64xf32>, vector<8x64xf32> -> vector<8x64xf32>
    %175 = vector.extract_strided_slice %171 {offsets = [0, 0], sizes = [8, 32], strides = [1, 1]} : vector<8x64xf32> to vector<8x32xf32>
    %176 = vector.extract_strided_slice %174 {offsets = [0, 0], sizes = [8, 32], strides = [1, 1]} : vector<8x64xf32> to vector<8x32xf32>
    %177 = arith.addf %175, %176 : vector<8x32xf32>
    %178 = arith.negf %177 : vector<8x32xf32>
    %179 = math.exp %178 : vector<8x32xf32>
    %cst_43 = arith.constant 1.000000e+00 : f32
    %180 = vector.broadcast %cst_43 : f32 to vector<8x32xf32>
    %181 = arith.addf %180, %179 : vector<8x32xf32>
    %182 = arith.divf %180, %181 : vector<8x32xf32>
    %183 = vector.extract_strided_slice %171 {offsets = [0, 32], sizes = [8, 32], strides = [1, 1]} : vector<8x64xf32> to vector<8x32xf32>
    %184 = vector.extract_strided_slice %174 {offsets = [0, 32], sizes = [8, 32], strides = [1, 1]} : vector<8x64xf32> to vector<8x32xf32>
    %185 = vector.broadcast %8 : vector<1x32xf32> to vector<8x32xf32>
    %186 = arith.addf %184, %185 : vector<8x32xf32>
    %187 = arith.mulf %182, %186 : vector<8x32xf32>
    %188 = arith.addf %183, %187 : vector<8x32xf32>
    %189 = math.tanh %188 : vector<8x32xf32>
    %190 = arith.subf %189, %170 : vector<8x32xf32>
    %191 = vector.broadcast %173 : vector<8x1xf32> to vector<8x32xf32>
    %192 = arith.mulf %191, %190 : vector<8x32xf32>
    %193 = arith.addf %170, %192 : vector<8x32xf32>
    %c0_44 = arith.constant 0 : index
    %c0_45 = arith.constant 0 : index
    %194 = vector.load %arg7[%c0_44, %c0_45] : memref<8x32xf32, #tpu.memory_space<vmem>>, vector<8x32xf32>
    tpu.vector_store %arg7[%c0_44, %c0_45], %193 {strides = array<i32>} : memref<8x32xf32, #tpu.memory_space<vmem>>, vector<8x32xf32>,
    return
  }
  func.func @transform_0(%arg0: i32) -> (i32, i32, i32) {
    %c0_i32 = arith.constant 0 : i32
    %c0_i32_0 = arith.constant 0 : i32
    %c0_i32_1 = arith.constant 0 : i32
    return %arg0, %c0_i32, %c0_i32_0 : i32, i32, i32
  }
  func.func @transform_1(%arg0: i32) -> (i32, i32, i32) {
    %c0_i32 = arith.constant 0 : i32
    %c0_i32_0 = arith.constant 0 : i32
    %c0_i32_1 = arith.constant 0 : i32
    return %c0_i32, %arg0, %c0_i32_0 : i32, i32, i32
  }
  func.func @transform_2(%arg0: i32) -> (i32, i32) {
    %c0_i32 = arith.constant 0 : i32
    %c0_i32_0 = arith.constant 0 : i32
    %c0_i32_1 = arith.constant 0 : i32
    return %c0_i32, %c0_i32_0 : i32, i32
  }
  func.func @transform_3(%arg0: i32) -> (i32, i32) {
    %c0_i32 = arith.constant 0 : i32
    %c0_i32_0 = arith.constant 0 : i32
    %c0_i32_1 = arith.constant 0 : i32
    return %c0_i32, %c0_i32_0 : i32, i32
  }
  func.func @transform_4(%arg0: i32) -> (i32, i32) {
    %c0_i32 = arith.constant 0 : i32
    %c0_i32_0 = arith.constant 0 : i32
    %c0_i32_1 = arith.constant 0 : i32
    return %c0_i32, %c0_i32_0 : i32, i32
  }
  func.func @transform_5(%arg0: i32) -> (i32, i32) {
    %c0_i32 = arith.constant 0 : i32
    %c0_i32_0 = arith.constant 0 : i32
    %c0_i32_1 = arith.constant 0 : i32
    return %c0_i32, %c0_i32_0 : i32, i32
  }
  func.func @transform_6(%arg0: i32) -> (i32, i32) {
    %c0_i32 = arith.constant 0 : i32
    %c0_i32_0 = arith.constant 0 : i32
    return %arg0, %c0_i32 : i32, i32
  }
}

</mosaic_0001>

<llo_original>
// kernel: tpu_custom_call.1
$region0: #{tpu_custom_call.1}
  #allocation0 [shape = 'u32[]', space=smem, size = 0x4, offset = 0x4, fixed_abs, tag = 'smem constant byte address 0x4 - core index']
  #allocation1 [shape = 'u32[144,128]{1,0:T(1,128)}', space=vmem, size = 0x12000, scoped, tag = 'internal scratch']
  %s0 = inlined_call_operand.vmem [shape: bf16[1,64,32], index: 0, kind: input, shape index: {}]
  %s1 = inlined_call_operand.vmem [shape: f32[8,8,1], index: 1, kind: input, shape index: {}]
  %s2 = inlined_call_operand.vmem [shape: bf16[32,64], index: 2, kind: input, shape index: {}]
  %s3 = inlined_call_operand.vmem [shape: f32[32,64], index: 3, kind: input, shape index: {}]
  %s4 = inlined_call_operand.vmem [shape: f32[1,64], index: 4, kind: input, shape index: {}]
  %s5 = inlined_call_operand.vmem [shape: f32[1,32], index: 5, kind: input, shape index: {}]
  %s6 = inlined_call_operand.hbm [shape: f32[8,32], index: 6, kind: output, shape index: {}]
  %s7 = sld [smem:[#allocation0]]
  $region34: #{tpu_custom_call.1} parent=0
    _
  %s9 = ssub.s32 1, %s7
  %s10 = scalar_select 0, %s9, %s7
  $region1: #{tpu_custom_call.1} parent=0
    #allocation2 [shape = 'u8[4096]{0}', space=vmem, size = 0x1000, scoped, tag = 'output window, operand 0, single buffered']
    #allocation3 [shape = 's32[1]{0}', space=sflag, size = 0x4, scoped, tag = 'scoped memory for tpu_custom_call.1']
    %11 = vsyncpa [#allocation3], 0
    // Predicated region
    $region2: #{tpu_custom_call.1} parent=1 // pred_check
      _
    $region3: #{tpu_custom_call.1} parent=1 // pred_check_branch
      %13 = sbr.rel (0) target = $region5
    $region4: #{tpu_custom_call.1} parent=1 // pred_region
      _
    $region5: #{tpu_custom_call.1} parent=1 // pred_fallthru
      _
    // Predicated region
    $region6: #{tpu_custom_call.1} parent=1 // pred_check
      _
    $region7: #{tpu_custom_call.1} parent=1 // pred_check_branch
      %15 = sbr.rel (0) target = $region9
    $region8: #{tpu_custom_call.1} parent=1 // pred_region
      _
    $region9: #{tpu_custom_call.1} parent=1 // pred_fallthru
      _
    // Predicated region
    $region10: #{tpu_custom_call.1} parent=1 // pred_check
      _
    $region11: #{tpu_custom_call.1} parent=1 // pred_check_branch
      %17 = sbr.rel (0) target = $region13
    $region12: #{tpu_custom_call.1} parent=1 // pred_region
      _
    $region13: #{tpu_custom_call.1} parent=1 // pred_fallthru
      _
    // Predicated region
    $region14: #{tpu_custom_call.1} parent=1 // pred_check
      _
    $region15: #{tpu_custom_call.1} parent=1 // pred_check_branch
      %19 = sbr.rel (0) target = $region17
    $region16: #{tpu_custom_call.1} parent=1 // pred_region
      _
    $region17: #{tpu_custom_call.1} parent=1 // pred_fallthru
      _
    // Predicated region
    $region18: #{tpu_custom_call.1} parent=1 // pred_check
      _
    $region19: #{tpu_custom_call.1} parent=1 // pred_check_branch
      %21 = sbr.rel (0) target = $region21
    $region20: #{tpu_custom_call.1} parent=1 // pred_region
      _
    $region21: #{tpu_custom_call.1} parent=1 // pred_fallthru
      _
    // Predicated region
    $region22: #{tpu_custom_call.1} parent=1 // pred_check
      _
    $region23: #{tpu_custom_call.1} parent=1 // pred_check_branch
      %23 = sbr.rel (0) target = $region25
    $region24: #{tpu_custom_call.1} parent=1 // pred_region
      _
    $region25: #{tpu_custom_call.1} parent=1 // pred_fallthru
      _
    %v25 = vld [vmem:[%s0] sm:$0xf]
    %v26 = vld [vmem:[%s0 + $0x4] sm:$0xf]
    %v27 = vld [vmem:[%s0 + $0x8] sm:$0xf]
    %v28 = vld [vmem:[%s0 + $0xc] sm:$0xf]
    %v29 = vld [vmem:[%s0 + $0x10] sm:$0xf]
    %v30 = vld [vmem:[%s0 + $0x14] sm:$0xf]
    %v31 = vld [vmem:[%s0 + $0x18] sm:$0xf]
    %v32 = vld [vmem:[%s0 + $0x1c] sm:$0xf]
    %v33 = vld [vmem:[%s2] sm:$0xf]
    %v34 = vld [vmem:[%s2 + $0x4] sm:$0xf]
    %v35 = vld [vmem:[%s2 + $0x8] sm:$0xf]
    %v36 = vld [vmem:[%s2 + $0xc] sm:$0xf]
    %v37 = vld [vmem:[%s4] sm:$0x1]
    %v39 = vlaneseq
    %v40 = vshrl.u32 %v39, 7
    %v41 = vsub.s32 0, %v40
    %v42 = vrot.slane %v37, %v41
    %v52 = vunpack.c.l.b16 %v25
    %v53 = vunpack.c.l.b16 %v26
    %v54 = vunpack.c.l.b16 %v27
    %v55 = vunpack.c.l.b16 %v28
    %v56 = vunpack.c.l.b16 %v29
    %v57 = vunpack.c.l.b16 %v30
    %v58 = vunpack.c.l.b16 %v31
    %v59 = vunpack.c.l.b16 %v32
    %v60 = vpack.c.b16 %v53, %v52
    %v61 = vpack.c.b16 %v55, %v54
    %v62 = vpack.c.b16 %v57, %v56
    %v63 = vpack.c.b16 %v59, %v58
    %v68 = vunpack.c.l.b16 %v33
    %v69 = vunpack.c.l.b16 %v34
    %v70 = vunpack.c.l.b16 %v35
    %v71 = vunpack.c.l.b16 %v36
    %v72 = vpack.c.b16 %v69, %v68
    %v73 = vpack.c.b16 %v71, %v70
    %vm76 = vcmask 261120
    %v78 = vsel %vm76, %v60, 0
    %v81 = vsel %vm76, %v61, 0
    %v84 = vsel %vm76, %v62, 0
    %v87 = vsel %vm76, %v63, 0
    %89 = vmatprep.subr.bf16.mxu0 0
    %90 = vmatpush1.bf16.msra.mxu0 0
    %91 = vmatprep.subr.bf16.mxu0 0
    %92 = vmatpush1.bf16.msra.mxu0 0
    %93 = vmatprep.subr.bf16.mxu0 0
    %94 = vmatpush1.bf16.msra.mxu0 0
    %95 = vmatprep.subr.bf16.mxu0 0
    %96 = vmatpush1.bf16.msra.mxu0 0
    %97 = vmatprep.subr.bf16.mxu0 0
    %98 = vmatpush1.bf16.msra.mxu0 0
    %99 = vmatprep.subr.bf16.mxu0 0
    %100 = vmatpush1.bf16.msra.mxu0 0
    %101 = vmatprep.subr.bf16.mxu0 0
    %102 = vmatpush1.bf16.msra.mxu0 %v73
    %103 = vmatprep.subr.bf16.mxu0 0
    %104 = vmatpush1.bf16.msra.mxu0 %v72
    %105 = vmatprep.subr.bf16.mxu0 0
    %106 = vmatpush2.bf16.msra.mxu0 0
    %107 = vmatprep.subr.bf16.mxu0 0
    %108 = vmatpush2.bf16.msra.mxu0 0
    %109 = vmatprep.subr.bf16.mxu0 0
    %110 = vmatpush2.bf16.msra.mxu0 0
    %111 = vmatprep.subr.bf16.mxu0 0
    %112 = vmatpush2.bf16.msra.mxu0 0
    %113 = vmatprep.subr.bf16.mxu0 0
    %114 = vmatpush2.bf16.msra.mxu0 0
    %115 = vmatprep.subr.bf16.mxu0 0
    %116 = vmatpush2.bf16.msra.mxu0 0
    %117 = vmatprep.subr.bf16.mxu0 0
    %118 = vmatpush2.bf16.msra.mxu0 0
    %119 = vmatprep.subr.bf16.mxu0 0
    %120 = vmatpush2.bf16.msra.mxu0 0
    %121 = vmatprep.mubr.bf16.mxu0 0
    %122 = vmatmul.mubr.bf16.gmra.mxu0 %v78
    %v123 = vpop.f32.mrf.mxu0
    %v124 = vadd.f32 %v42, %v123
    %v125 = vpop.f32.mrf.mxu0
    %v126 = vpop.f32.mrf.mxu0
    %v127 = vadd.f32 %v42, %v126
    %v128 = vpop.f32.mrf.mxu0
    %129 = vmatprep.mubr.bf16.mxu0 0
    %130 = vmatmul.mubr.bf16.gmra.mxu0 %v81
    %v131 = vpop.f32.mrf.mxu0
    %v132 = vadd.f32 %v42, %v131
    %v133 = vpop.f32.mrf.mxu0
    %v134 = vpop.f32.mrf.mxu0
    %v135 = vadd.f32 %v42, %v134
    %v136 = vpop.f32.mrf.mxu0
    %137 = vmatprep.mubr.bf16.mxu0 0
    %138 = vmatmul.mubr.bf16.gmra.mxu0 %v84
    %v139 = vpop.f32.mrf.mxu0
    %v140 = vadd.f32 %v42, %v139
    %v141 = vpop.f32.mrf.mxu0
    %v142 = vpop.f32.mrf.mxu0
    %v143 = vadd.f32 %v42, %v142
    %v144 = vpop.f32.mrf.mxu0
    %145 = vmatprep.mubr.bf16.mxu0 0
    %146 = vmatmul.mubr.bf16.gmra.mxu0 %v87
    %v147 = vpop.f32.mrf.mxu0
    %v148 = vadd.f32 %v42, %v147
    %v149 = vpop.f32.mrf.mxu0
    %v150 = vpop.f32.mrf.mxu0
    %v151 = vadd.f32 %v42, %v150
    %v152 = vpop.f32.mrf.mxu0
    %153 = vdwg.mxu0
    %v154 = vld [vmem:[%s3] sm:$0xff]
    %v155 = vld [vmem:[%s3 + $0x8] sm:$0xff]
    %v156 = vld [vmem:[%s3 + $0x10] sm:$0xff]
    %v157 = vld [vmem:[%s3 + $0x18] sm:$0xff]
    %v158 = vld [vmem:[%s5] sm:$0x1]
    %v159 = vld [vmem:[%s1] sm:$0xff]
    %v161 = vsel %vm76, 0.0, 0
    %163 = vmatprep.subr.mxu0 0.0
    %164 = vmatpush1.msra.mxu0 0.0
    %165 = vmatprep.subr.mxu0 0.0
    %166 = vmatpush1.msra.mxu0 0.0
    %167 = vmatprep.subr.mxu0 0.0
    %168 = vmatpush1.msra.mxu0 0.0
    %169 = vmatprep.subr.mxu0 0.0
    %170 = vmatpush1.msra.mxu0 0.0
    %171 = vmatprep.subr.mxu0 0.0
    %172 = vmatpush1.msra.mxu0 0.0
    %173 = vmatprep.subr.mxu0 0.0
    %174 = vmatpush1.msra.mxu0 0.0
    %175 = vmatprep.subr.mxu0 0.0
    %176 = vmatpush1.msra.mxu0 0.0
    %177 = vmatprep.subr.mxu0 0.0
    %178 = vmatpush1.msra.mxu0 0.0
    %179 = vmatprep.subr.mxu0 0.0
    %180 = vmatpush1.msra.mxu0 0.0
    %181 = vmatprep.subr.mxu0 0.0
    %182 = vmatpush1.msra.mxu0 0.0
    %183 = vmatprep.subr.mxu0 0.0
    %184 = vmatpush1.msra.mxu0 0.0
    %185 = vmatprep.subr.mxu0 0.0
    %186 = vmatpush1.msra.mxu0 0.0
    %187 = vmatprep.subr.mxu0 0.0
    %188 = vmatpush1.msra.mxu0 %v157
    %189 = vmatprep.subr.mxu0 0.0
    %190 = vmatpush1.msra.mxu0 %v156
    %191 = vmatprep.subr.mxu0 0.0
    %192 = vmatpush1.msra.mxu0 %v155
    %193 = vmatprep.subr.mxu0 0.0
    %194 = vmatpush1.msra.mxu0 %v154
    %195 = vmatprep.subr.mxu0 0.0
    %196 = vmatpush2.msra.mxu0 0.0
    %197 = vmatprep.subr.mxu0 0.0
    %198 = vmatpush2.msra.mxu0 0.0
    %199 = vmatprep.subr.mxu0 0.0
    %200 = vmatpush2.msra.mxu0 0.0
    %201 = vmatprep.subr.mxu0 0.0
    %202 = vmatpush2.msra.mxu0 0.0
    %203 = vmatprep.subr.mxu0 0.0
    %204 = vmatpush2.msra.mxu0 0.0
    %205 = vmatprep.subr.mxu0 0.0
    %206 = vmatpush2.msra.mxu0 0.0
    %207 = vmatprep.subr.mxu0 0.0
    %208 = vmatpush2.msra.mxu0 0.0
    %209 = vmatprep.subr.mxu0 0.0
    %210 = vmatpush2.msra.mxu0 0.0
    %211 = vmatprep.subr.mxu0 0.0
    %212 = vmatpush2.msra.mxu0 0.0
    %213 = vmatprep.subr.mxu0 0.0
    %214 = vmatpush2.msra.mxu0 0.0
    %215 = vmatprep.subr.mxu0 0.0
    %216 = vmatpush2.msra.mxu0 0.0
    %217 = vmatprep.subr.mxu0 0.0
    %218 = vmatpush2.msra.mxu0 0.0
    %219 = vmatprep.subr.mxu0 0.0
    %220 = vmatpush2.msra.mxu0 0.0
    %221 = vmatprep.subr.mxu0 0.0
    %222 = vmatpush2.msra.mxu0 0.0
    %223 = vmatprep.subr.mxu0 0.0
    %224 = vmatpush2.msra.mxu0 0.0
    %225 = vmatprep.subr.mxu0 0.0
    %226 = vmatpush2.msra.mxu0 0.0
    %227 = vmatprep.mubr.f32.mxu0 0.0
    %228 = vmatmul.mubr.f32.gmra.mxu0 %v161
    %v229 = vpop.f32.mrf.mxu0
    %v230 = vadd.f32 0.0, %v229
    %v231 = vpop.f32.mrf.mxu0
    %232 = vdwg.mxu0
    %v233 = vadd.f32 %v124, %v230
    %v234 = vxor.u32 %v233, 2147483648
    %v235 = vmul.f32 %v234, 1.442695
    %v236 = vpow.pop %v235
    %v237 = vadd.f32 %v236, 1.0
    %v238 = vrcp.pop %v237
    %v239 = vmul.f32 1.0, %v238
    %v241 = vlaneseq
    %v242 = vshrl.u32 %v241, 7
    %v243 = vsub.s32 0, %v242
    %v244 = vrot.slane %v158, %v243
    %245 = vrot.lane.b32.xlu0 %v244, 32
    %v246 = vpop.permute.xlu0 %245
    %v248 = vadd.f32 %v230, %v246
    %250 = vrot.lane.b32.xlu0 %v248, 96
    %v251 = vpop.permute.xlu0 %250
    %v253 = vmul.f32 %v239, %v251
    %255 = vrot.lane.b32.xlu0 %v253, 32
    %v256 = vpop.permute.xlu0 %255
    %v258 = vadd.f32 %v124, %v256
    %v259 = vtanh.pop %v258
    %261 = vset.pattern.permute.xlu0 0
    %262 = vperm.xlu0 %261, %v159
    %v263 = vpop.permute.xlu0 %262
    %v265 = vmul.f32 %v263, %v259
    %v266 = vadd.f32 %v265, 0.0
    %s267 = scalar_lea.vmem %s1, 8
    %v268 = vld [vmem:[%s267] sm:$0xff]
    %270 = vrot.lane.b32.xlu0 %v266, 96
    %v271 = vpop.permute.xlu0 %270
    %v272 = vsel %vm76, %v271, 0
    %274 = vmatprep.subr.mxu0 0.0
    %275 = vmatpush1.msra.mxu0 0.0
    %276 = vmatprep.subr.mxu0 0.0
    %277 = vmatpush1.msra.mxu0 0.0
    %278 = vmatprep.subr.mxu0 0.0
    %279 = vmatpush1.msra.mxu0 0.0
    %280 = vmatprep.subr.mxu0 0.0
    %281 = vmatpush1.msra.mxu0 0.0
    %282 = vmatprep.subr.mxu0 0.0
    %283 = vmatpush1.msra.mxu0 0.0
    %284 = vmatprep.subr.mxu0 0.0
    %285 = vmatpush1.msra.mxu0 0.0
    %286 = vmatprep.subr.mxu0 0.0
    %287 = vmatpush1.msra.mxu0 0.0
    %288 = vmatprep.subr.mxu0 0.0
    %289 = vmatpush1.msra.mxu0 0.0
    %290 = vmatprep.subr.mxu0 0.0
    %291 = vmatpush1.msra.mxu0 0.0
    %292 = vmatprep.subr.mxu0 0.0
    %293 = vmatpush1.msra.mxu0 0.0
    %294 = vmatprep.subr.mxu0 0.0
    %295 = vmatpush1.msra.mxu0 0.0
    %296 = vmatprep.subr.mxu0 0.0
    %297 = vmatpush1.msra.mxu0 0.0
    %298 = vmatprep.subr.mxu0 0.0
    %299 = vmatpush1.msra.mxu0 %v157
    %300 = vmatprep.subr.mxu0 0.0
    %301 = vmatpush1.msra.mxu0 %v156
    %302 = vmatprep.subr.mxu0 0.0
    %303 = vmatpush1.msra.mxu0 %v155
    %304 = vmatprep.subr.mxu0 0.0
    %305 = vmatpush1.msra.mxu0 %v154
    %306 = vmatprep.subr.mxu0 0.0
    %307 = vmatpush2.msra.mxu0 0.0
    %308 = vmatprep.subr.mxu0 0.0
    %309 = vmatpush2.msra.mxu0 0.0
    %310 = vmatprep.subr.mxu0 0.0
    %311 = vmatpush2.msra.mxu0 0.0
    %312 = vmatprep.subr.mxu0 0.0
    %313 = vmatpush2.msra.mxu0 0.0
    %314 = vmatprep.subr.mxu0 0.0
    %315 = vmatpush2.msra.mxu0 0.0
    %316 = vmatprep.subr.mxu0 0.0
    %317 = vmatpush2.msra.mxu0 0.0
    %318 = vmatprep.subr.mxu0 0.0
    %319 = vmatpush2.msra.mxu0 0.0
    %320 = vmatprep.subr.mxu0 0.0
    %321 = vmatpush2.msra.mxu0 0.0
    %322 = vmatprep.subr.mxu0 0.0
    %323 = vmatpush2.msra.mxu0 0.0
    %324 = vmatprep.subr.mxu0 0.0
    %325 = vmatpush2.msra.mxu0 0.0
    %326 = vmatprep.subr.mxu0 0.0
    %327 = vmatpush2.msra.mxu0 0.0
    %328 = vmatprep.subr.mxu0 0.0
    %329 = vmatpush2.msra.mxu0 0.0
    %330 = vmatprep.subr.mxu0 0.0
    %331 = vmatpush2.msra.mxu0 0.0
    %332 = vmatprep.subr.mxu0 0.0
    %333 = vmatpush2.msra.mxu0 0.0
    %334 = vmatprep.subr.mxu0 0.0
    %335 = vmatpush2.msra.mxu0 0.0
    %336 = vmatprep.subr.mxu0 0.0
    %337 = vmatpush2.msra.mxu0 0.0
    %338 = vmatprep.mubr.f32.mxu0 0.0
    %339 = vmatmul.mubr.f32.gmra.mxu0 %v272
    %v340 = vpop.f32.mrf.mxu0
    %v341 = vadd.f32 0.0, %v340
    %v342 = vpop.f32.mrf.mxu0
    %343 = vdwg.mxu0
    %v344 = vadd.f32 %v127, %v341
    %v345 = vxor.u32 %v344, 2147483648
    %v346 = vmul.f32 %v345, 1.442695
    %v347 = vpow.pop %v346
    %v348 = vadd.f32 %v347, 1.0
    %v349 = vrcp.pop %v348
    %v350 = vmul.f32 1.0, %v349
    %v351 = vadd.f32 %v341, %v246
    %353 = vrot.lane.b32.xlu0 %v351, 96
    %v354 = vpop.permute.xlu0 %353
    %v356 = vmul.f32 %v350, %v354
    %358 = vrot.lane.b32.xlu0 %v356, 32
    %v359 = vpop.permute.xlu0 %358
    %v361 = vadd.f32 %v127, %v359
    %v362 = vtanh.pop %v361
    %v363 = vsub.f32 %v362, %v266
    %365 = vset.pattern.permute.xlu0 0
    %366 = vperm.xlu0 %365, %v268
    %v367 = vpop.permute.xlu0 %366
    %v369 = vmul.f32 %v367, %v363
    %v370 = vadd.f32 %v266, %v369
    %s371 = scalar_lea.vmem %s1, 16
    %v372 = vld [vmem:[%s371] sm:$0xff]
    %374 = vrot.lane.b32.xlu0 %v370, 96
    %v375 = vpop.permute.xlu0 %374
    %v376 = vsel %vm76, %v375, 0
    %378 = vmatprep.subr.mxu0 0.0
    %379 = vmatpush1.msra.mxu0 0.0
    %380 = vmatprep.subr.mxu0 0.0
    %381 = vmatpush1.msra.mxu0 0.0
    %382 = vmatprep.subr.mxu0 0.0
    %383 = vmatpush1.msra.mxu0 0.0
    %384 = vmatprep.subr.mxu0 0.0
    %385 = vmatpush1.msra.mxu0 0.0
    %386 = vmatprep.subr.mxu0 0.0
    %387 = vmatpush1.msra.mxu0 0.0
    %388 = vmatprep.subr.mxu0 0.0
    %389 = vmatpush1.msra.mxu0 0.0
    %390 = vmatprep.subr.mxu0 0.0
    %391 = vmatpush1.msra.mxu0 0.0
    %392 = vmatprep.subr.mxu0 0.0
    %393 = vmatpush1.msra.mxu0 0.0
    %394 = vmatprep.subr.mxu0 0.0
    %395 = vmatpush1.msra.mxu0 0.0
    %396 = vmatprep.subr.mxu0 0.0
    %397 = vmatpush1.msra.mxu0 0.0
    %398 = vmatprep.subr.mxu0 0.0
    %399 = vmatpush1.msra.mxu0 0.0
    %400 = vmatprep.subr.mxu0 0.0
    %401 = vmatpush1.msra.mxu0 0.0
    %402 = vmatprep.subr.mxu0 0.0
    %403 = vmatpush1.msra.mxu0 %v157
    %404 = vmatprep.subr.mxu0 0.0
    %405 = vmatpush1.msra.mxu0 %v156
    %406 = vmatprep.subr.mxu0 0.0
    %407 = vmatpush1.msra.mxu0 %v155
    %408 = vmatprep.subr.mxu0 0.0
    %409 = vmatpush1.msra.mxu0 %v154
    %410 = vmatprep.subr.mxu0 0.0
    %411 = vmatpush2.msra.mxu0 0.0
    %412 = vmatprep.subr.mxu0 0.0
    %413 = vmatpush2.msra.mxu0 0.0
    %414 = vmatprep.subr.mxu0 0.0
    %415 = vmatpush2.msra.mxu0 0.0
    %416 = vmatprep.subr.mxu0 0.0
    %417 = vmatpush2.msra.mxu0 0.0
    %418 = vmatprep.subr.mxu0 0.0
    %419 = vmatpush2.msra.mxu0 0.0
    %420 = vmatprep.subr.mxu0 0.0
    %421 = vmatpush2.msra.mxu0 0.0
    %422 = vmatprep.subr.mxu0 0.0
    %423 = vmatpush2.msra.mxu0 0.0
    %424 = vmatprep.subr.mxu0 0.0
    %425 = vmatpush2.msra.mxu0 0.0
    %426 = vmatprep.subr.mxu0 0.0
    %427 = vmatpush2.msra.mxu0 0.0
    %428 = vmatprep.subr.mxu0 0.0
    %429 = vmatpush2.msra.mxu0 0.0
    %430 = vmatprep.subr.mxu0 0.0
    %431 = vmatpush2.msra.mxu0 0.0
    %432 = vmatprep.subr.mxu0 0.0
    %433 = vmatpush2.msra.mxu0 0.0
    %434 = vmatprep.subr.mxu0 0.0
    %435 = vmatpush2.msra.mxu0 0.0
    %436 = vmatprep.subr.mxu0 0.0
    %437 = vmatpush2.msra.mxu0 0.0
    %438 = vmatprep.subr.mxu0 0.0
    %439 = vmatpush2.msra.mxu0 0.0
    %440 = vmatprep.subr.mxu0 0.0
    %441 = vmatpush2.msra.mxu0 0.0
    %442 = vmatprep.mubr.f32.mxu0 0.0
    %443 = vmatmul.mubr.f32.gmra.mxu0 %v376
    %v444 = vpop.f32.mrf.mxu0
    %v445 = vadd.f32 0.0, %v444
    %v446 = vpop.f32.mrf.mxu0
    %447 = vdwg.mxu0
    %v448 = vadd.f32 %v132, %v445
    %v449 = vxor.u32 %v448, 2147483648
    %v450 = vmul.f32 %v449, 1.442695
    %v451 = vpow.pop %v450
    %v452 = vadd.f32 %v451, 1.0
    %v453 = vrcp.pop %v452
    %v454 = vmul.f32 1.0, %v453
    %v455 = vadd.f32 %v445, %v246
    %457 = vrot.lane.b32.xlu0 %v455, 96
    %v458 = vpop.permute.xlu0 %457
    %v460 = vmul.f32 %v454, %v458
    %462 = vrot.lane.b32.xlu0 %v460, 32
    %v463 = vpop.permute.xlu0 %462
    %v465 = vadd.f32 %v132, %v463
    %v466 = vtanh.pop %v465
    %v467 = vsub.f32 %v466, %v370
    %469 = vset.pattern.permute.xlu0 0
    %470 = vperm.xlu0 %469, %v372
    %v471 = vpop.permute.xlu0 %470
    %v473 = vmul.f32 %v471, %v467
    %v474 = vadd.f32 %v370, %v473
    %s475 = scalar_lea.vmem %s1, 24
    %v476 = vld [vmem:[%s475] sm:$0xff]
    %478 = vrot.lane.b32.xlu0 %v474, 96
    %v479 = vpop.permute.xlu0 %478
    %v480 = vsel %vm76, %v479, 0
    %482 = vmatprep.subr.mxu0 0.0
    %483 = vmatpush1.msra.mxu0 0.0
    %484 = vmatprep.subr.mxu0 0.0
    %485 = vmatpush1.msra.mxu0 0.0
    %486 = vmatprep.subr.mxu0 0.0
    %487 = vmatpush1.msra.mxu0 0.0
    %488 = vmatprep.subr.mxu0 0.0
    %489 = vmatpush1.msra.mxu0 0.0
    %490 = vmatprep.subr.mxu0 0.0
    %491 = vmatpush1.msra.mxu0 0.0
    %492 = vmatprep.subr.mxu0 0.0
    %493 = vmatpush1.msra.mxu0 0.0
    %494 = vmatprep.subr.mxu0 0.0
    %495 = vmatpush1.msra.mxu0 0.0
    %496 = vmatprep.subr.mxu0 0.0
    %497 = vmatpush1.msra.mxu0 0.0
    %498 = vmatprep.subr.mxu0 0.0
    %499 = vmatpush1.msra.mxu0 0.0
    %500 = vmatprep.subr.mxu0 0.0
    %501 = vmatpush1.msra.mxu0 0.0
    %502 = vmatprep.subr.mxu0 0.0
    %503 = vmatpush1.msra.mxu0 0.0
    %504 = vmatprep.subr.mxu0 0.0
    %505 = vmatpush1.msra.mxu0 0.0
    %506 = vmatprep.subr.mxu0 0.0
    %507 = vmatpush1.msra.mxu0 %v157
    %508 = vmatprep.subr.mxu0 0.0
    %509 = vmatpush1.msra.mxu0 %v156
    %510 = vmatprep.subr.mxu0 0.0
    %511 = vmatpush1.msra.mxu0 %v155
    %512 = vmatprep.subr.mxu0 0.0
    %513 = vmatpush1.msra.mxu0 %v154
    %514 = vmatprep.subr.mxu0 0.0
    %515 = vmatpush2.msra.mxu0 0.0
    %516 = vmatprep.subr.mxu0 0.0
    %517 = vmatpush2.msra.mxu0 0.0
    %518 = vmatprep.subr.mxu0 0.0
    %519 = vmatpush2.msra.mxu0 0.0
    %520 = vmatprep.subr.mxu0 0.0
    %521 = vmatpush2.msra.mxu0 0.0
    %522 = vmatprep.subr.mxu0 0.0
    %523 = vmatpush2.msra.mxu0 0.0
    %524 = vmatprep.subr.mxu0 0.0
    %525 = vmatpush2.msra.mxu0 0.0
    %526 = vmatprep.subr.mxu0 0.0
    %527 = vmatpush2.msra.mxu0 0.0
    %528 = vmatprep.subr.mxu0 0.0
    %529 = vmatpush2.msra.mxu0 0.0
    %530 = vmatprep.subr.mxu0 0.0
    %531 = vmatpush2.msra.mxu0 0.0
    %532 = vmatprep.subr.mxu0 0.0
    %533 = vmatpush2.msra.mxu0 0.0
    %534 = vmatprep.subr.mxu0 0.0
    %535 = vmatpush2.msra.mxu0 0.0
    %536 = vmatprep.subr.mxu0 0.0
    %537 = vmatpush2.msra.mxu0 0.0
    %538 = vmatprep.subr.mxu0 0.0
    %539 = vmatpush2.msra.mxu0 0.0
    %540 = vmatprep.subr.mxu0 0.0
    %541 = vmatpush2.msra.mxu0 0.0
    %542 = vmatprep.subr.mxu0 0.0
    %543 = vmatpush2.msra.mxu0 0.0
    %544 = vmatprep.subr.mxu0 0.0
    %545 = vmatpush2.msra.mxu0 0.0
    %546 = vmatprep.mubr.f32.mxu0 0.0
    %547 = vmatmul.mubr.f32.gmra.mxu0 %v480
    %v548 = vpop.f32.mrf.mxu0
    %v549 = vadd.f32 0.0, %v548
    %v550 = vpop.f32.mrf.mxu0
    %551 = vdwg.mxu0
    %v552 = vadd.f32 %v135, %v549
    %v553 = vxor.u32 %v552, 2147483648
    %v554 = vmul.f32 %v553, 1.442695
    %v555 = vpow.pop %v554
    %v556 = vadd.f32 %v555, 1.0
    %v557 = vrcp.pop %v556
    %v558 = vmul.f32 1.0, %v557
    %v559 = vadd.f32 %v549, %v246
    %561 = vrot.lane.b32.xlu0 %v559, 96
    %v562 = vpop.permute.xlu0 %561
    %v564 = vmul.f32 %v558, %v562
    %566 = vrot.lane.b32.xlu0 %v564, 32
    %v567 = vpop.permute.xlu0 %566
    %v569 = vadd.f32 %v135, %v567
    %v570 = vtanh.pop %v569
    %v571 = vsub.f32 %v570, %v474
    %573 = vset.pattern.permute.xlu0 0
    %574 = vperm.xlu0 %573, %v476
    %v575 = vpop.permute.xlu0 %574
    %v577 = vmul.f32 %v575, %v571
    %v578 = vadd.f32 %v474, %v577
    %s579 = scalar_lea.vmem %s1, 32
    %v580 = vld [vmem:[%s579] sm:$0xff]
    %582 = vrot.lane.b32.xlu0 %v578, 96
    %v583 = vpop.permute.xlu0 %582
    %v584 = vsel %vm76, %v583, 0
    %586 = vmatprep.subr.mxu0 0.0
    %587 = vmatpush1.msra.mxu0 0.0
    %588 = vmatprep.subr.mxu0 0.0
    %589 = vmatpush1.msra.mxu0 0.0
    %590 = vmatprep.subr.mxu0 0.0
    %591 = vmatpush1.msra.mxu0 0.0
    %592 = vmatprep.subr.mxu0 0.0
    %593 = vmatpush1.msra.mxu0 0.0
    %594 = vmatprep.subr.mxu0 0.0
    %595 = vmatpush1.msra.mxu0 0.0
    %596 = vmatprep.subr.mxu0 0.0
    %597 = vmatpush1.msra.mxu0 0.0
    %598 = vmatprep.subr.mxu0 0.0
    %599 = vmatpush1.msra.mxu0 0.0
    %600 = vmatprep.subr.mxu0 0.0
    %601 = vmatpush1.msra.mxu0 0.0
    %602 = vmatprep.subr.mxu0 0.0
    %603 = vmatpush1.msra.mxu0 0.0
    %604 = vmatprep.subr.mxu0 0.0
    %605 = vmatpush1.msra.mxu0 0.0
    %606 = vmatprep.subr.mxu0 0.0
    %607 = vmatpush1.msra.mxu0 0.0
    %608 = vmatprep.subr.mxu0 0.0
    %609 = vmatpush1.msra.mxu0 0.0
    %610 = vmatprep.subr.mxu0 0.0
    %611 = vmatpush1.msra.mxu0 %v157
    %612 = vmatprep.subr.mxu0 0.0
    %613 = vmatpush1.msra.mxu0 %v156
    %614 = vmatprep.subr.mxu0 0.0
    %615 = vmatpush1.msra.mxu0 %v155
    %616 = vmatprep.subr.mxu0 0.0
    %617 = vmatpush1.msra.mxu0 %v154
    %618 = vmatprep.subr.mxu0 0.0
    %619 = vmatpush2.msra.mxu0 0.0
    %620 = vmatprep.subr.mxu0 0.0
    %621 = vmatpush2.msra.mxu0 0.0
    %622 = vmatprep.subr.mxu0 0.0
    %623 = vmatpush2.msra.mxu0 0.0
    %624 = vmatprep.subr.mxu0 0.0
    %625 = vmatpush2.msra.mxu0 0.0
    %626 = vmatprep.subr.mxu0 0.0
    %627 = vmatpush2.msra.mxu0 0.0
    %628 = vmatprep.subr.mxu0 0.0
    %629 = vmatpush2.msra.mxu0 0.0
    %630 = vmatprep.subr.mxu0 0.0
    %631 = vmatpush2.msra.mxu0 0.0
    %632 = vmatprep.subr.mxu0 0.0
    %633 = vmatpush2.msra.mxu0 0.0
    %634 = vmatprep.subr.mxu0 0.0
    %635 = vmatpush2.msra.mxu0 0.0
    %636 = vmatprep.subr.mxu0 0.0
    %637 = vmatpush2.msra.mxu0 0.0
    %638 = vmatprep.subr.mxu0 0.0
    %639 = vmatpush2.msra.mxu0 0.0
    %640 = vmatprep.subr.mxu0 0.0
    %641 = vmatpush2.msra.mxu0 0.0
    %642 = vmatprep.subr.mxu0 0.0
    %643 = vmatpush2.msra.mxu0 0.0
    %644 = vmatprep.subr.mxu0 0.0
    %645 = vmatpush2.msra.mxu0 0.0
    %646 = vmatprep.subr.mxu0 0.0
    %647 = vmatpush2.msra.mxu0 0.0
    %648 = vmatprep.subr.mxu0 0.0
    %649 = vmatpush2.msra.mxu0 0.0
    %650 = vmatprep.mubr.f32.mxu0 0.0
    %651 = vmatmul.mubr.f32.gmra.mxu0 %v584
    %v652 = vpop.f32.mrf.mxu0
    %v653 = vadd.f32 0.0, %v652
    %v654 = vpop.f32.mrf.mxu0
    %655 = vdwg.mxu0
    %v656 = vadd.f32 %v140, %v653
    %v657 = vxor.u32 %v656, 2147483648
    %v658 = vmul.f32 %v657, 1.442695
    %v659 = vpow.pop %v658
    %v660 = vadd.f32 %v659, 1.0
    %v661 = vrcp.pop %v660
    %v662 = vmul.f32 1.0, %v661
    %v663 = vadd.f32 %v653, %v246
    %665 = vrot.lane.b32.xlu0 %v663, 96
    %v666 = vpop.permute.xlu0 %665
    %v668 = vmul.f32 %v662, %v666
    %670 = vrot.lane.b32.xlu0 %v668, 32
    %v671 = vpop.permute.xlu0 %670
    %v673 = vadd.f32 %v140, %v671
    %v674 = vtanh.pop %v673
    %v675 = vsub.f32 %v674, %v578
    %677 = vset.pattern.permute.xlu0 0
    %678 = vperm.xlu0 %677, %v580
    %v679 = vpop.permute.xlu0 %678
    %v681 = vmul.f32 %v679, %v675
    %v682 = vadd.f32 %v578, %v681
    %s683 = scalar_lea.vmem %s1, 40
    %v684 = vld [vmem:[%s683] sm:$0xff]
    %686 = vrot.lane.b32.xlu0 %v682, 96
    %v687 = vpop.permute.xlu0 %686
    %v688 = vsel %vm76, %v687, 0
    %690 = vmatprep.subr.mxu0 0.0
    %691 = vmatpush1.msra.mxu0 0.0
    %692 = vmatprep.subr.mxu0 0.0
    %693 = vmatpush1.msra.mxu0 0.0
    %694 = vmatprep.subr.mxu0 0.0
    %695 = vmatpush1.msra.mxu0 0.0
    %696 = vmatprep.subr.mxu0 0.0
    %697 = vmatpush1.msra.mxu0 0.0
    %698 = vmatprep.subr.mxu0 0.0
    %699 = vmatpush1.msra.mxu0 0.0
    %700 = vmatprep.subr.mxu0 0.0
    %701 = vmatpush1.msra.mxu0 0.0
    %702 = vmatprep.subr.mxu0 0.0
    %703 = vmatpush1.msra.mxu0 0.0
    %704 = vmatprep.subr.mxu0 0.0
    %705 = vmatpush1.msra.mxu0 0.0
    %706 = vmatprep.subr.mxu0 0.0
    %707 = vmatpush1.msra.mxu0 0.0
    %708 = vmatprep.subr.mxu0 0.0
    %709 = vmatpush1.msra.mxu0 0.0
    %710 = vmatprep.subr.mxu0 0.0
    %711 = vmatpush1.msra.mxu0 0.0
    %712 = vmatprep.subr.mxu0 0.0
    %713 = vmatpush1.msra.mxu0 0.0
    %714 = vmatprep.subr.mxu0 0.0
    %715 = vmatpush1.msra.mxu0 %v157
    %716 = vmatprep.subr.mxu0 0.0
    %717 = vmatpush1.msra.mxu0 %v156
    %718 = vmatprep.subr.mxu0 0.0
    %719 = vmatpush1.msra.mxu0 %v155
    %720 = vmatprep.subr.mxu0 0.0
    %721 = vmatpush1.msra.mxu0 %v154
    %722 = vmatprep.subr.mxu0 0.0
    %723 = vmatpush2.msra.mxu0 0.0
    %724 = vmatprep.subr.mxu0 0.0
    %725 = vmatpush2.msra.mxu0 0.0
    %726 = vmatprep.subr.mxu0 0.0
    %727 = vmatpush2.msra.mxu0 0.0
    %728 = vmatprep.subr.mxu0 0.0
    %729 = vmatpush2.msra.mxu0 0.0
    %730 = vmatprep.subr.mxu0 0.0
    %731 = vmatpush2.msra.mxu0 0.0
    %732 = vmatprep.subr.mxu0 0.0
    %733 = vmatpush2.msra.mxu0 0.0
    %734 = vmatprep.subr.mxu0 0.0
    %735 = vmatpush2.msra.mxu0 0.0
    %736 = vmatprep.subr.mxu0 0.0
    %737 = vmatpush2.msra.mxu0 0.0
    %738 = vmatprep.subr.mxu0 0.0
    %739 = vmatpush2.msra.mxu0 0.0
    %740 = vmatprep.subr.mxu0 0.0
    %741 = vmatpush2.msra.mxu0 0.0
    %742 = vmatprep.subr.mxu0 0.0
    %743 = vmatpush2.msra.mxu0 0.0
    %744 = vmatprep.subr.mxu0 0.0
    %745 = vmatpush2.msra.mxu0 0.0
    %746 = vmatprep.subr.mxu0 0.0
    %747 = vmatpush2.msra.mxu0 0.0
    %748 = vmatprep.subr.mxu0 0.0
    %749 = vmatpush2.msra.mxu0 0.0
    %750 = vmatprep.subr.mxu0 0.0
    %751 = vmatpush2.msra.mxu0 0.0
    %752 = vmatprep.subr.mxu0 0.0
    %753 = vmatpush2.msra.mxu0 0.0
    %754 = vmatprep.mubr.f32.mxu0 0.0
    %755 = vmatmul.mubr.f32.gmra.mxu0 %v688
    %v756 = vpop.f32.mrf.mxu0
    %v757 = vadd.f32 0.0, %v756
    %v758 = vpop.f32.mrf.mxu0
    %759 = vdwg.mxu0
    %v760 = vadd.f32 %v143, %v757
    %v761 = vxor.u32 %v760, 2147483648
    %v762 = vmul.f32 %v761, 1.442695
    %v763 = vpow.pop %v762
    %v764 = vadd.f32 %v763, 1.0
    %v765 = vrcp.pop %v764
    %v766 = vmul.f32 1.0, %v765
    %v767 = vadd.f32 %v757, %v246
    %769 = vrot.lane.b32.xlu0 %v767, 96
    %v770 = vpop.permute.xlu0 %769
    %v772 = vmul.f32 %v766, %v770
    %774 = vrot.lane.b32.xlu0 %v772, 32
    %v775 = vpop.permute.xlu0 %774
    %v777 = vadd.f32 %v143, %v775
    %v778 = vtanh.pop %v777
    %v779 = vsub.f32 %v778, %v682
    %781 = vset.pattern.permute.xlu0 0
    %782 = vperm.xlu0 %781, %v684
    %v783 = vpop.permute.xlu0 %782
    %v785 = vmul.f32 %v783, %v779
    %v786 = vadd.f32 %v682, %v785
    %s787 = scalar_lea.vmem %s1, 48
    %v788 = vld [vmem:[%s787] sm:$0xff]
    %790 = vrot.lane.b32.xlu0 %v786, 96
    %v791 = vpop.permute.xlu0 %790
    %v792 = vsel %vm76, %v791, 0
    %794 = vmatprep.subr.mxu0 0.0
    %795 = vmatpush1.msra.mxu0 0.0
    %796 = vmatprep.subr.mxu0 0.0
    %797 = vmatpush1.msra.mxu0 0.0
    %798 = vmatprep.subr.mxu0 0.0
    %799 = vmatpush1.msra.mxu0 0.0
    %800 = vmatprep.subr.mxu0 0.0
    %801 = vmatpush1.msra.mxu0 0.0
    %802 = vmatprep.subr.mxu0 0.0
    %803 = vmatpush1.msra.mxu0 0.0
    %804 = vmatprep.subr.mxu0 0.0
    %805 = vmatpush1.msra.mxu0 0.0
    %806 = vmatprep.subr.mxu0 0.0
    %807 = vmatpush1.msra.mxu0 0.0
    %808 = vmatprep.subr.mxu0 0.0
    %809 = vmatpush1.msra.mxu0 0.0
    %810 = vmatprep.subr.mxu0 0.0
    %811 = vmatpush1.msra.mxu0 0.0
    %812 = vmatprep.subr.mxu0 0.0
    %813 = vmatpush1.msra.mxu0 0.0
    %814 = vmatprep.subr.mxu0 0.0
    %815 = vmatpush1.msra.mxu0 0.0
    %816 = vmatprep.subr.mxu0 0.0
    %817 = vmatpush1.msra.mxu0 0.0
    %818 = vmatprep.subr.mxu0 0.0
    %819 = vmatpush1.msra.mxu0 %v157
    %820 = vmatprep.subr.mxu0 0.0
    %821 = vmatpush1.msra.mxu0 %v156
    %822 = vmatprep.subr.mxu0 0.0
    %823 = vmatpush1.msra.mxu0 %v155
    %824 = vmatprep.subr.mxu0 0.0
    %825 = vmatpush1.msra.mxu0 %v154
    %826 = vmatprep.subr.mxu0 0.0
    %827 = vmatpush2.msra.mxu0 0.0
    %828 = vmatprep.subr.mxu0 0.0
    %829 = vmatpush2.msra.mxu0 0.0
    %830 = vmatprep.subr.mxu0 0.0
    %831 = vmatpush2.msra.mxu0 0.0
    %832 = vmatprep.subr.mxu0 0.0
    %833 = vmatpush2.msra.mxu0 0.0
    %834 = vmatprep.subr.mxu0 0.0
    %835 = vmatpush2.msra.mxu0 0.0
    %836 = vmatprep.subr.mxu0 0.0
    %837 = vmatpush2.msra.mxu0 0.0
    %838 = vmatprep.subr.mxu0 0.0
    %839 = vmatpush2.msra.mxu0 0.0
    %840 = vmatprep.subr.mxu0 0.0
    %841 = vmatpush2.msra.mxu0 0.0
    %842 = vmatprep.subr.mxu0 0.0
    %843 = vmatpush2.msra.mxu0 0.0
    %844 = vmatprep.subr.mxu0 0.0
    %845 = vmatpush2.msra.mxu0 0.0
    %846 = vmatprep.subr.mxu0 0.0
    %847 = vmatpush2.msra.mxu0 0.0
    %848 = vmatprep.subr.mxu0 0.0
    %849 = vmatpush2.msra.mxu0 0.0
    %850 = vmatprep.subr.mxu0 0.0
    %851 = vmatpush2.msra.mxu0 0.0
    %852 = vmatprep.subr.mxu0 0.0
    %853 = vmatpush2.msra.mxu0 0.0
    %854 = vmatprep.subr.mxu0 0.0
    %855 = vmatpush2.msra.mxu0 0.0
    %856 = vmatprep.subr.mxu0 0.0
    %857 = vmatpush2.msra.mxu0 0.0
    %858 = vmatprep.mubr.f32.mxu0 0.0
    %859 = vmatmul.mubr.f32.gmra.mxu0 %v792
    %v860 = vpop.f32.mrf.mxu0
    %v861 = vadd.f32 0.0, %v860
    %v862 = vpop.f32.mrf.mxu0
    %863 = vdwg.mxu0
    %v864 = vadd.f32 %v148, %v861
    %v865 = vxor.u32 %v864, 2147483648
    %v866 = vmul.f32 %v865, 1.442695
    %v867 = vpow.pop %v866
    %v868 = vadd.f32 %v867, 1.0
    %v869 = vrcp.pop %v868
    %v870 = vmul.f32 1.0, %v869
    %v871 = vadd.f32 %v861, %v246
    %873 = vrot.lane.b32.xlu0 %v871, 96
    %v874 = vpop.permute.xlu0 %873
    %v876 = vmul.f32 %v870, %v874
    %878 = vrot.lane.b32.xlu0 %v876, 32
    %v879 = vpop.permute.xlu0 %878
    %v881 = vadd.f32 %v148, %v879
    %v882 = vtanh.pop %v881
    %v883 = vsub.f32 %v882, %v786
    %885 = vset.pattern.permute.xlu0 0
    %886 = vperm.xlu0 %885, %v788
    %v887 = vpop.permute.xlu0 %886
    %v889 = vmul.f32 %v887, %v883
    %v890 = vadd.f32 %v786, %v889
    %s891 = scalar_lea.vmem %s1, 56
    %v892 = vld [vmem:[%s891] sm:$0xff]
    %894 = vrot.lane.b32.xlu0 %v890, 96
    %v895 = vpop.permute.xlu0 %894
    %v896 = vsel %vm76, %v895, 0
    %898 = vmatprep.subr.mxu0 0.0
    %899 = vmatpush1.msra.mxu0 0.0
    %900 = vmatprep.subr.mxu0 0.0
    %901 = vmatpush1.msra.mxu0 0.0
    %902 = vmatprep.subr.mxu0 0.0
    %903 = vmatpush1.msra.mxu0 0.0
    %904 = vmatprep.subr.mxu0 0.0
    %905 = vmatpush1.msra.mxu0 0.0
    %906 = vmatprep.subr.mxu0 0.0
    %907 = vmatpush1.msra.mxu0 0.0
    %908 = vmatprep.subr.mxu0 0.0
    %909 = vmatpush1.msra.mxu0 0.0
    %910 = vmatprep.subr.mxu0 0.0
    %911 = vmatpush1.msra.mxu0 0.0
    %912 = vmatprep.subr.mxu0 0.0
    %913 = vmatpush1.msra.mxu0 0.0
    %914 = vmatprep.subr.mxu0 0.0
    %915 = vmatpush1.msra.mxu0 0.0
    %916 = vmatprep.subr.mxu0 0.0
    %917 = vmatpush1.msra.mxu0 0.0
    %918 = vmatprep.subr.mxu0 0.0
    %919 = vmatpush1.msra.mxu0 0.0
    %920 = vmatprep.subr.mxu0 0.0
    %921 = vmatpush1.msra.mxu0 0.0
    %922 = vmatprep.subr.mxu0 0.0
    %923 = vmatpush1.msra.mxu0 %v157
    %924 = vmatprep.subr.mxu0 0.0
    %925 = vmatpush1.msra.mxu0 %v156
    %926 = vmatprep.subr.mxu0 0.0
    %927 = vmatpush1.msra.mxu0 %v155
    %928 = vmatprep.subr.mxu0 0.0
    %929 = vmatpush1.msra.mxu0 %v154
    %930 = vmatprep.subr.mxu0 0.0
    %931 = vmatpush2.msra.mxu0 0.0
    %932 = vmatprep.subr.mxu0 0.0
    %933 = vmatpush2.msra.mxu0 0.0
    %934 = vmatprep.subr.mxu0 0.0
    %935 = vmatpush2.msra.mxu0 0.0
    %936 = vmatprep.subr.mxu0 0.0
    %937 = vmatpush2.msra.mxu0 0.0
    %938 = vmatprep.subr.mxu0 0.0
    %939 = vmatpush2.msra.mxu0 0.0
    %940 = vmatprep.subr.mxu0 0.0
    %941 = vmatpush2.msra.mxu0 0.0
    %942 = vmatprep.subr.mxu0 0.0
    %943 = vmatpush2.msra.mxu0 0.0
    %944 = vmatprep.subr.mxu0 0.0
    %945 = vmatpush2.msra.mxu0 0.0
    %946 = vmatprep.subr.mxu0 0.0
    %947 = vmatpush2.msra.mxu0 0.0
    %948 = vmatprep.subr.mxu0 0.0
    %949 = vmatpush2.msra.mxu0 0.0
    %950 = vmatprep.subr.mxu0 0.0
    %951 = vmatpush2.msra.mxu0 0.0
    %952 = vmatprep.subr.mxu0 0.0
    %953 = vmatpush2.msra.mxu0 0.0
    %954 = vmatprep.subr.mxu0 0.0
    %955 = vmatpush2.msra.mxu0 0.0
    %956 = vmatprep.subr.mxu0 0.0
    %957 = vmatpush2.msra.mxu0 0.0
    %958 = vmatprep.subr.mxu0 0.0
    %959 = vmatpush2.msra.mxu0 0.0
    %960 = vmatprep.subr.mxu0 0.0
    %961 = vmatpush2.msra.mxu0 0.0
    %962 = vmatprep.mubr.f32.mxu0 0.0
    %963 = vmatmul.mubr.f32.gmra.mxu0 %v896
    %v964 = vpop.f32.mrf.mxu0
    %v965 = vadd.f32 0.0, %v964
    %v966 = vpop.f32.mrf.mxu0
    %967 = vdwg.mxu0
    %v968 = vadd.f32 %v151, %v965
    %v969 = vxor.u32 %v968, 2147483648
    %v970 = vmul.f32 %v969, 1.442695
    %v971 = vpow.pop %v970
    %v972 = vadd.f32 %v971, 1.0
    %v973 = vrcp.pop %v972
    %v974 = vmul.f32 1.0, %v973
    %v975 = vadd.f32 %v965, %v246
    %977 = vrot.lane.b32.xlu0 %v975, 96
    %v978 = vpop.permute.xlu0 %977
    %v980 = vmul.f32 %v974, %v978
    %982 = vrot.lane.b32.xlu0 %v980, 32
    %v983 = vpop.permute.xlu0 %982
    %v985 = vadd.f32 %v151, %v983
    %v986 = vtanh.pop %v985
    %v987 = vsub.f32 %v986, %v890
    %989 = vset.pattern.permute.xlu0 0
    %990 = vperm.xlu0 %989, %v892
    %v991 = vpop.permute.xlu0 %990
    %v993 = vmul.f32 %v991, %v987
    %v994 = vadd.f32 %v890, %v993
    %996 = vrot.lane.b32.xlu0 %v994, 96
    %v997 = vpop.permute.xlu0 %996
    %999 = vst.msk [vmem:[#allocation2] sm:$0xff] %vm76, %v997
    // Predicated region
    $region26: #{tpu_custom_call.1} parent=1 // pred_check
      _
    $region27: #{tpu_custom_call.1} parent=1 // pred_check_branch
      %1001 = sbr.rel (0) target = $region29
    $region28: #{tpu_custom_call.1} parent=1 // pred_region
      %s1003 = ssub.s32 128, 128
      %1004 = vsyncadd [#allocation3], %s1003
      %s1006 = sshll.u32 [#allocation2], 4
      %s1007 = int_to_ptr.vmem [resolvable:$true] %s1006
      %1009 = dma.vmem_to_hbm [thread:$0]  %s1007, 128, %s6, [#allocation3]
    $region29: #{tpu_custom_call.1} parent=1 // pred_fallthru
      _
    // Predicated region
    $region30: #{tpu_custom_call.1} parent=1 // pred_check
      _
    $region31: #{tpu_custom_call.1} parent=1 // pred_check_branch
      %1011 = sbr.rel (0) target = $region33
    $region32: #{tpu_custom_call.1} parent=1 // pred_region
      %1012 = dma.done [#allocation3], 128
    $region33: #{tpu_custom_call.1} parent=1 // pred_fallthru
      _
    %1013 = vsyncpa [#allocation3], 1

</llo_original>
